<compile_context>
chip_gen: v7x
topology: tpu7x:2x2x1
jax: 0.10.0
libtpu: 0.0.40
codegen_flags: <defaults>
</compile_context>

<pallas_src>
import jax
import jax.numpy as jnp
from jax.experimental import pallas as pl
from jax.experimental.pallas import tpu as pltpu


def _round_up(x: int, m: int) -> int:
    return (x + m - 1) // m * m


# Row tile for large batches (review: sweep 256/512/1024; 512 keeps the f32
# intermediate h round-trip off the ld/st critical path and fits v5e's VMEM).
_LARGE_TILE_M = 512
# Max K (flattened-input) chunk: bf16 w1 chunk = tile_k*H*2 B; with the default
# double buffer this stays comfortably inside v5e's 16 MiB scoped default.
_MAX_TILE_K = 2048


def _embedding_kernel(x_ref, w1_ref, b1_ref, w2_ref, b2_ref, out_ref, acc_ref):
    # x_ref : (TM, TK) f32/bf16   w1_ref: (TK, H) bf16   b1_ref: (1, H) f32
    # w2_ref: (H, E) bf16         b2_ref: (1, E) f32     out_ref: (TM, E) f32
    # acc_ref: (TM, H) f32 scratch, persistent across the K grid axis.
    k = pl.program_id(1)

    @pl.when(k == 0)
    def _init():
        acc_ref[...] = jnp.zeros_like(acc_ref)

    # In-kernel cast to the weight dtype (no-op if already bf16): the VPU cast
    # is hidden under the MXU and avoids a wrapper-side HBM cast pass.
    x = x_ref[...].astype(w1_ref.dtype)
    acc_ref[...] += jnp.dot(x, w1_ref[...], preferred_element_type=jnp.float32)

    @pl.when(k == pl.num_programs(1) - 1)
    def _finalize():
        h = jnp.maximum(acc_ref[...] + b1_ref[...], 0.0)   # bias + ReLU (VPU)
        h = h.astype(w2_ref.dtype)                          # bf16 for 2nd MXU pass
        o = jnp.dot(h, w2_ref[...], preferred_element_type=jnp.float32)
        out_ref[...] = (o + b2_ref[...]).astype(out_ref.dtype)


def _embedding_pallas(x_flat, w1, b1, w2, b2):
    """x_flat: (N, D) f32 or bf16 -> (N, E) f32. Row/K-tiled, weights resident."""
    n, d = x_flat.shape

    # Defensive one-time cast (perf trap otherwise): the contract of this port
    # is bf16 weights on the MXU with f32 accumulation.
    if w1.dtype != jnp.bfloat16:
        w1 = w1.astype(jnp.bfloat16)
    if w2.dtype != jnp.bfloat16:
        w2 = w2.astype(jnp.bfloat16)
    b1 = b1.astype(jnp.float32).reshape(1, -1)
    b2 = b2.astype(jnp.float32).reshape(1, -1)
    h = w1.shape[1]
    e = w2.shape[1]

    # Row tile: 512 for large batches; small batches round up to 16 sublanes
    # (native bf16 tile), avoiding masked partial stores on the output.
    if n >= _LARGE_TILE_M:
        tile_m = _LARGE_TILE_M
    else:
        tile_m = _round_up(max(n, 1), 16)
    n_pad = _round_up(n, tile_m)

    # K tile over the flattened input dim D: single step if it fits, else
    # stream w1 in (tile_k, H) chunks so huge D never blows VMEM.
    if d <= _MAX_TILE_K:
        tile_k, d_pad = d, d
    else:
        tile_k = _MAX_TILE_K
        d_pad = _round_up(d, tile_k)

    if (n_pad, d_pad) != (n, d):
        x_flat = jnp.pad(x_flat, ((0, n_pad - n), (0, d_pad - d)))
    if d_pad != d:
        w1 = jnp.pad(w1, ((0, d_pad - d), (0, 0)))   # zero rows: no-op in the dot

    m_tiles = n_pad // tile_m
    k_tiles = d_pad // tile_k
    grid = (m_tiles, k_tiles)

    # Grid-invariant operands: one VMEM copy (constant index_map already avoids
    # re-DMA; Buffered(1) drops the redundant second buffer).
    resident = pl.Buffered(1)
    if k_tiles == 1:
        w1_spec = pl.BlockSpec((tile_k, h), lambda i, k: (k, 0),
                               pipeline_mode=resident)
    else:
        w1_spec = pl.BlockSpec((tile_k, h), lambda i, k: (k, 0))  # streamed

    x_item = jnp.dtype(x_flat.dtype).itemsize
    w1_bufs = 1 if k_tiles == 1 else 2
    est_vmem = (2 * tile_m * tile_k * x_item          # activation tiles (double buf)
                + w1_bufs * tile_k * h * 2            # w1 block(s), bf16
                + h * e * 2 + (h + e) * 4             # w2 + biases (single copy)
                + 2 * tile_m * e * 4                  # output tiles (double buf)
                + tile_m * h * 4)                     # f32 accumulator scratch
    vmem_limit = int(min(max(2 * est_vmem + (4 << 20), 32 << 20), 48 << 20))

    cost = pl.CostEstimate(
        flops=2 * n_pad * (d_pad * h + h * e),
        transcendentals=0,
        bytes_accessed=(n_pad * d_pad * x_item        # activations in
                        + d_pad * h * 2               # w1 (bf16)
                        + h * e * 2                   # w2 (bf16)
                        + (h + e) * 4                 # biases
                        + n_pad * e * 4),             # output
    )

    out = pl.pallas_call(
        _embedding_kernel,
        out_shape=jax.ShapeDtypeStruct((n_pad, e), jnp.float32),
        grid_spec=pltpu.PrefetchScalarGridSpec(
            num_scalar_prefetch=0,
            grid=grid,
            in_specs=[
                pl.BlockSpec((tile_m, tile_k), lambda i, k: (i, k)),  # activations
                w1_spec,                                              # w1
                pl.BlockSpec((1, h), lambda i, k: (0, 0),
                             pipeline_mode=resident),                 # b1
                pl.BlockSpec((h, e), lambda i, k: (0, 0),
                             pipeline_mode=resident),                 # w2
                pl.BlockSpec((1, e), lambda i, k: (0, 0),
                             pipeline_mode=resident),                 # b2
            ],
            out_specs=pl.BlockSpec((tile_m, e), lambda i, k: (i, 0)),
            scratch_shapes=[pltpu.VMEM((tile_m, h), jnp.float32)],
        ),
        compiler_params=pltpu.CompilerParams(
            dimension_semantics=("parallel", "arbitrary"),
            vmem_limit_bytes=vmem_limit,
        ),
        cost_estimate=cost,
    )(x_flat, w1, b1, w2, b2)
    return out[:n]


def init_embedding_params(key, in_dim, hidden_dim, embed_dim):
    """Float32 'module parameters' (mirrors the PyTorch module's storage)."""
    k1, k2, k3, k4 = jax.random.split(key, 4)
    w1 = jax.random.uniform(k1, (in_dim, hidden_dim), jnp.float32, -0.05, 0.05)
    b1 = jax.random.uniform(k2, (1, hidden_dim), jnp.float32, -0.05, 0.05)
    w2 = jax.random.uniform(k3, (hidden_dim, embed_dim), jnp.float32, -0.05, 0.05)
    b2 = jax.random.uniform(k4, (1, embed_dim), jnp.float32, -0.05, 0.05)
    return dict(w1=w1, b1=b1, w2=w2, b2=b2)


def prepare_params(params):
    """One-time cast: bf16 weights (halve weight DMA), f32 biases."""
    return dict(
        w1=params["w1"].astype(jnp.bfloat16),
        b1=params["b1"].astype(jnp.float32),
        w2=params["w2"].astype(jnp.bfloat16),
        b2=params["b2"].astype(jnp.float32),
    )


@jax.jit
def triplet_net_forward(params, x1, x2, x3):
    """TripletNet.forward: returns (emb(x1), emb(x2), emb(x3))."""
    b = x1.shape[0]
    w1, b1, w2, b2 = params["w1"], params["b1"], params["w2"], params["b2"]
    flat = [x.reshape(b, -1) for x in (x1, x2, x3)]   # torch .view(N, -1) order
    d = flat[0].shape[1]

    # Static (trace-time) policy: one fused call (single weight DMA, pays a
    # 3*B*D concat+cast copy) only while that copy is cheaper than re-reading
    # the weights two more times; otherwise three per-input calls with the
    # f32->bf16 cast done inside the kernel (no extra HBM pass at all).
    weight_bytes = (w1.size + w2.size) * 2 + (b1.size + b2.size) * 4
    concat_bytes = 3 * b * d * 6                      # read f32 + write bf16 /elem
    if concat_bytes <= 2 * weight_bytes:
        xs = jnp.concatenate(flat, axis=0).astype(jnp.bfloat16)
        out = _embedding_pallas(xs, w1, b1, w2, b2)
        return out[:b], out[b:2 * b], out[2 * b:3 * b]
    o1 = _embedding_pallas(flat[0], w1, b1, w2, b2)
    o2 = _embedding_pallas(flat[1], w1, b1, w2, b2)
    o3 = _embedding_pallas(flat[2], w1, b1, w2, b2)
    return o1, o2, o3


@jax.jit
def get_embedding(params, x):
    """TripletNet.get_embedding: single-input embedding (f32 streamed straight
    into the kernel; bf16 cast happens on the VPU inside the kernel)."""
    b = x.shape[0]
    return _embedding_pallas(x.reshape(b, -1), params["w1"], params["b1"],
                             params["w2"], params["b2"])


if __name__ == "__main__":
    B, C, H, W = 2, 4, 16, 16          # small NCHW inputs
    IN_DIM = C * H * W                 # 1024
    HIDDEN = 256
    EMBED = 128

    key = jax.random.PRNGKey(0)
    kp, k1, k2, k3 = jax.random.split(key, 4)

    params_f32 = init_embedding_params(kp, IN_DIM, HIDDEN, EMBED)
    params = prepare_params(params_f32)

    x1 = jax.random.normal(k1, (B, C, H, W), jnp.float32)
    x2 = jax.random.normal(k2, (B, C, H, W), jnp.float32)
    x3 = jax.random.normal(k3, (B, C, H, W), jnp.float32)

    o1, o2, o3 = triplet_net_forward(params, x1, x2, x3)
    jax.block_until_ready((o1, o2, o3))
    assert o1.shape == (B, EMBED) and o2.shape == (B, EMBED) and o3.shape == (B, EMBED)

    oe = get_embedding(params, x1)
    jax.block_until_ready(oe)
    assert oe.shape == (B, EMBED)

    # Reference following the same bf16-weight / f32-accumulate recipe (the
    # kernel's documented precision contract).
    def ref_bf16(x):
        xb = x.reshape(x.shape[0], -1).astype(jnp.bfloat16)
        hh = jnp.dot(xb, params["w1"], preferred_element_type=jnp.float32) + params["b1"]
        hh = jnp.maximum(hh, 0.0).astype(jnp.bfloat16)
        return jnp.dot(hh, params["w2"], preferred_element_type=jnp.float32) + params["b2"]

    # Full-precision reference (original f32 PyTorch semantics) at a looser
    # tolerance — the bf16 downgrade is an explicit accuracy decision.
    def ref_f32(x):
        hh = jnp.maximum(x.reshape(x.shape[0], -1) @ params_f32["w1"] + params_f32["b1"], 0.0)
        return hh @ params_f32["w2"] + params_f32["b2"]

    for o, x in ((o1, x1), (o2, x2), (o3, x3), (oe, x1)):
        assert jnp.allclose(o, ref_bf16(x), atol=2e-3, rtol=2e-3)
        assert jnp.allclose(o, ref_f32(x), atol=5e-2, rtol=5e-2)

    print("KERNEL_OK")
</pallas_src>

<mosaic_0001>
module attributes {stable_mosaic.version = 11 : i64} {
  func.func @_embedding_kernel(%arg0: i32, %arg1: i32, %arg2: memref<16x1024xbf16, #tpu.memory_space<vmem>>, %arg3: memref<1024x256xbf16, #tpu.memory_space<vmem>>, %arg4: memref<1x256xf32, #tpu.memory_space<vmem>>, %arg5: memref<256x128xbf16, #tpu.memory_space<vmem>>, %arg6: memref<1x128xf32, #tpu.memory_space<vmem>>, %arg7: memref<16x128xf32, #tpu.memory_space<vmem>>, %arg8: memref<16x256xf32, #tpu.memory_space<vmem>>) attributes {dimension_semantics = [#tpu.dimension_semantics<parallel>, #tpu.dimension_semantics<arbitrary>], iteration_bounds = array<i64: 1, 1>, scalar_prefetch = 0 : i64, scratch_operands = 1 : i64, tpu.core_type = #tpu.core_type<tc>, window_params = [{transform_indices = @transform_0, window_bounds = array<i64: 16, 1024>}, {pipeline_mode = #tpu.pipeline_mode<synchronous>, transform_indices = @transform_1, window_bounds = array<i64: 1024, 256>}, {pipeline_mode = #tpu.pipeline_mode<synchronous>, transform_indices = @transform_2, window_bounds = array<i64: 1, 256>}, {pipeline_mode = #tpu.pipeline_mode<synchronous>, transform_indices = @transform_3, window_bounds = array<i64: 256, 128>}, {pipeline_mode = #tpu.pipeline_mode<synchronous>, transform_indices = @transform_4, window_bounds = array<i64: 1, 128>}, {transform_indices = @transform_5, window_bounds = array<i64: 16, 128>}]} {
    %c0_i32 = arith.constant 0 : i32
    %0 = arith.cmpi eq, %arg1, %c0_i32 : i32
    %1 = arith.extui %0 : i1 to i32
    %c0_i32_0 = arith.constant 0 : i32
    %2 = arith.cmpi ne, %1, %c0_i32_0 : i32
    scf.if %2 {
      %cst_10 = arith.constant 0.000000e+00 : f32
      %12 = vector.broadcast %cst_10 : f32 to vector<16x256xf32>
      %c0_11 = arith.constant 0 : index
      %c0_12 = arith.constant 0 : index
      %13 = vector.load %arg8[%c0_11, %c0_12] : memref<16x256xf32, #tpu.memory_space<vmem>>, vector<16x256xf32>
      tpu.vector_store %arg8[%c0_11, %c0_12], %12 {strides = array<i32>} : memref<16x256xf32, #tpu.memory_space<vmem>>, vector<16x256xf32>,
    } else {
    }
    %c0 = arith.constant 0 : index
    %c0_1 = arith.constant 0 : index
    %3 = vector.load %arg2[%c0, %c0_1] : memref<16x1024xbf16, #tpu.memory_space<vmem>>, vector<16x1024xbf16>
    %c0_2 = arith.constant 0 : index
    %c0_3 = arith.constant 0 : index
    %4 = vector.load %arg8[%c0_2, %c0_3] : memref<16x256xf32, #tpu.memory_space<vmem>>, vector<16x256xf32>
    %c0_4 = arith.constant 0 : index
    %c0_5 = arith.constant 0 : index
    %5 = vector.load %arg3[%c0_4, %c0_5] : memref<1024x256xbf16, #tpu.memory_space<vmem>>, vector<1024x256xbf16>
    %cst = arith.constant dense<0.000000e+00> : vector<16x256xf32>
    %6 = tpu.matmul %3, %5, %cst {dimension_numbers = #tpu.dot_dimension_numbers<[1], [0], [0], [1], [0, 0, 1, 1], [], []>} : vector<16x1024xbf16>, vector<1024x256xbf16>, vector<16x256xf32> -> vector<16x256xf32>
    %7 = arith.addf %4, %6 : vector<16x256xf32>
    %c0_6 = arith.constant 0 : index
    %c0_7 = arith.constant 0 : index
    %8 = vector.load %arg8[%c0_6, %c0_7] : memref<16x256xf32, #tpu.memory_space<vmem>>, vector<16x256xf32>
    tpu.vector_store %arg8[%c0_6, %c0_7], %7 {strides = array<i32>} : memref<16x256xf32, #tpu.memory_space<vmem>>, vector<16x256xf32>,
    %c0_i32_8 = arith.constant 0 : i32
    %9 = arith.cmpi eq, %arg1, %c0_i32_8 : i32
    %10 = arith.extui %9 : i1 to i32
    %c0_i32_9 = arith.constant 0 : i32
    %11 = arith.cmpi ne, %10, %c0_i32_9 : i32
    scf.if %11 {
      %c0_10 = arith.constant 0 : index
      %c0_11 = arith.constant 0 : index
      %12 = vector.load %arg8[%c0_10, %c0_11] : memref<16x256xf32, #tpu.memory_space<vmem>>, vector<16x256xf32>
      %c0_12 = arith.constant 0 : index
      %c0_13 = arith.constant 0 : index
      %13 = vector.load %arg4[%c0_12, %c0_13] : memref<1x256xf32, #tpu.memory_space<vmem>>, vector<1x256xf32>
      %14 = vector.broadcast %13 : vector<1x256xf32> to vector<16x256xf32>
      %15 = arith.addf %12, %14 : vector<16x256xf32>
      %cst_14 = arith.constant 0.000000e+00 : f32
      %16 = vector.broadcast %cst_14 : f32 to vector<16x256xf32>
      %17 = arith.maximumf %15, %16 : vector<16x256xf32>
      %18 = arith.truncf %17 : vector<16x256xf32> to vector<16x256xbf16>
      %c0_15 = arith.constant 0 : index
      %c0_16 = arith.constant 0 : index
      %19 = vector.load %arg5[%c0_15, %c0_16] : memref<256x128xbf16, #tpu.memory_space<vmem>>, vector<256x128xbf16>
      %cst_17 = arith.constant dense<0.000000e+00> : vector<16x128xf32>
      %20 = tpu.matmul %18, %19, %cst_17 {dimension_numbers = #tpu.dot_dimension_numbers<[1], [0], [0], [1], [0, 0, 1, 1], [], []>} : vector<16x256xbf16>, vector<256x128xbf16>, vector<16x128xf32> -> vector<16x128xf32>
      %c0_18 = arith.constant 0 : index
      %c0_19 = arith.constant 0 : index
      %21 = vector.load %arg6[%c0_18, %c0_19] : memref<1x128xf32, #tpu.memory_space<vmem>>, vector<1x128xf32>
      %22 = vector.broadcast %21 : vector<1x128xf32> to vector<16x128xf32>
      %23 = arith.addf %20, %22 : vector<16x128xf32>
      %c0_20 = arith.constant 0 : index
      %c0_21 = arith.constant 0 : index
      %24 = vector.load %arg7[%c0_20, %c0_21] : memref<16x128xf32, #tpu.memory_space<vmem>>, vector<16x128xf32>
      tpu.vector_store %arg7[%c0_20, %c0_21], %23 {strides = array<i32>} : memref<16x128xf32, #tpu.memory_space<vmem>>, vector<16x128xf32>,
    } else {
    }
    return
  }
  func.func @transform_0(%arg0: i32, %arg1: i32) -> (i32, i32) {
    %c0_i32 = arith.constant 0 : i32
    return %arg0, %arg1 : i32, i32
  }
  func.func @transform_1(%arg0: i32, %arg1: i32) -> (i32, i32) {
    %c0_i32 = arith.constant 0 : i32
    %c0_i32_0 = arith.constant 0 : i32
    return %arg1, %c0_i32 : i32, i32
  }
  func.func @transform_2(%arg0: i32, %arg1: i32) -> (i32, i32) {
    %c0_i32 = arith.constant 0 : i32
    %c0_i32_0 = arith.constant 0 : i32
    %c0_i32_1 = arith.constant 0 : i32
    return %c0_i32, %c0_i32_0 : i32, i32
  }
  func.func @transform_3(%arg0: i32, %arg1: i32) -> (i32, i32) {
    %c0_i32 = arith.constant 0 : i32
    %c0_i32_0 = arith.constant 0 : i32
    %c0_i32_1 = arith.constant 0 : i32
    return %c0_i32, %c0_i32_0 : i32, i32
  }
  func.func @transform_4(%arg0: i32, %arg1: i32) -> (i32, i32) {
    %c0_i32 = arith.constant 0 : i32
    %c0_i32_0 = arith.constant 0 : i32
    %c0_i32_1 = arith.constant 0 : i32
    return %c0_i32, %c0_i32_0 : i32, i32
  }
  func.func @transform_5(%arg0: i32, %arg1: i32) -> (i32, i32) {
    %c0_i32 = arith.constant 0 : i32
    %c0_i32_0 = arith.constant 0 : i32
    return %arg0, %c0_i32 : i32, i32
  }
}

</mosaic_0001>

<llo_original>
// kernel: triplet_net_forward.1
$region0: #{triplet_net_forward.1}
  #allocation0 [shape = 'u32[]', space=smem, size = 0x4, offset = 0x4, fixed_abs, tag = 'smem constant byte address 0x4 - core index']
  #allocation1 [shape = 'u32[144,128]{1,0:T(1,128)}', space=vmem, size = 0x12000, scoped, tag = 'internal scratch']
  #allocation2 [shape = 'f32[16,256]{1,0:T(8,128)}', space=vmem, size = 0x4000, scoped, tag = 'scratch operand']
  %s0 = inlined_call_operand.vmem [shape: bf16[16,1024], index: 0, kind: input, shape index: {}]
  %s1 = inlined_call_operand.hbm [shape: bf16[1024,256], index: 1, kind: input, shape index: {}]
  %s2 = inlined_call_operand.vmem [shape: f32[1,256], index: 2, kind: input, shape index: {}]
  %s3 = inlined_call_operand.vmem [shape: bf16[256,128], index: 3, kind: input, shape index: {}]
  %s4 = inlined_call_operand.vmem [shape: f32[1,128], index: 4, kind: input, shape index: {}]
  %s5 = inlined_call_operand.vmem [shape: f32[16,128], index: 5, kind: output, shape index: {}]
  %s6 = sld [smem:[#allocation0]]
  $region42: #{triplet_net_forward.1} parent=0
    _
  %s8 = ssub.s32 1, %s6
  %s9 = scalar_select 0, %s8, %s6
  $region1: #{triplet_net_forward.1} parent=0
    #allocation3 [shape = 'u8[524288]{0}', space=vmem, size = 0x80000, scoped, tag = 'input window, operand 1, single buffered']
    #allocation4 [shape = 's32[1]{0}', space=sflag, size = 0x4, scoped, tag = 'scoped memory for triplet_net_forward.1']
    %10 = vsyncpa [#allocation4], 0
    // Predicated region
    $region2: #{triplet_net_forward.1} parent=1 // pred_check
      _
    $region3: #{triplet_net_forward.1} parent=1 // pred_check_branch
      %12 = sbr.rel (0) target = $region5
    $region4: #{triplet_net_forward.1} parent=1 // pred_region
      _
    $region5: #{triplet_net_forward.1} parent=1 // pred_fallthru
      _
    // Predicated region
    $region6: #{triplet_net_forward.1} parent=1 // pred_check
      _
    $region7: #{triplet_net_forward.1} parent=1 // pred_check_branch
      %14 = sbr.rel (0) target = $region9
    $region8: #{triplet_net_forward.1} parent=1 // pred_region
      %s16 = ssub.s32 16384, 16384
      %17 = vsyncadd [#allocation4], %s16
      %s18 = sshll.u32 [#allocation3], 4
      %s19 = int_to_ptr.vmem [resolvable:$true] %s18
      %24 = dma.hbm_to_vmem [thread:$0]  %s1, 16384, %s19, [#allocation4], 128, 128, 8
    $region9: #{triplet_net_forward.1} parent=1 // pred_fallthru
      _
    // Predicated region
    $region10: #{triplet_net_forward.1} parent=1 // pred_check
      _
    $region11: #{triplet_net_forward.1} parent=1 // pred_check_branch
      %26 = sbr.rel (0) target = $region13
    $region12: #{triplet_net_forward.1} parent=1 // pred_region
      _
    $region13: #{triplet_net_forward.1} parent=1 // pred_fallthru
      _
    // Predicated region
    $region14: #{triplet_net_forward.1} parent=1 // pred_check
      _
    $region15: #{triplet_net_forward.1} parent=1 // pred_check_branch
      %28 = sbr.rel (0) target = $region17
    $region16: #{triplet_net_forward.1} parent=1 // pred_region
      _
    $region17: #{triplet_net_forward.1} parent=1 // pred_fallthru
      _
    // Predicated region
    $region18: #{triplet_net_forward.1} parent=1 // pred_check
      _
    $region19: #{triplet_net_forward.1} parent=1 // pred_check_branch
      %30 = sbr.rel (0) target = $region21
    $region20: #{triplet_net_forward.1} parent=1 // pred_region
      _
    $region21: #{triplet_net_forward.1} parent=1 // pred_fallthru
      _
    // Predicated region
    $region22: #{triplet_net_forward.1} parent=1 // pred_check
      _
    $region23: #{triplet_net_forward.1} parent=1 // pred_check_branch
      %32 = sbr.rel (0) target = $region25
    $region24: #{triplet_net_forward.1} parent=1 // pred_region
      %33 = dma.done [#allocation4], 16384
    $region25: #{triplet_net_forward.1} parent=1 // pred_fallthru
      _
    %p35 = scmp.eq.s32.totalorder 0, 0
    // Predicated region
    $region26: #{triplet_net_forward.1} parent=1 // pred_check
      %p36 = pneg %p35
    $region27: #{triplet_net_forward.1} parent=1 // pred_check_branch
      %38 = sbr.rel (%p36) target = $region29
    $region28: #{triplet_net_forward.1} parent=1 // pred_region
      %39 = vst [vmem:[#allocation2] sm:$0xff] 0.0
      %40 = vst [vmem:[#allocation2 + $0x8] sm:$0xff] 0.0
      %41 = vst [vmem:[#allocation2 + $0x10] sm:$0xff] 0.0
      %42 = vst [vmem:[#allocation2 + $0x18] sm:$0xff] 0.0
    $region29: #{triplet_net_forward.1} parent=1 // pred_fallthru
      _
    %v43 = vld [vmem:[%s0] sm:$0xff]
    %v44 = vld [vmem:[%s0 + $0x8] sm:$0xff]
    %v45 = vld [vmem:[%s0 + $0x10] sm:$0xff]
    %v46 = vld [vmem:[%s0 + $0x18] sm:$0xff]
    %v47 = vld [vmem:[%s0 + $0x20] sm:$0xff]
    %v48 = vld [vmem:[%s0 + $0x28] sm:$0xff]
    %v49 = vld [vmem:[%s0 + $0x30] sm:$0xff]
    %v50 = vld [vmem:[%s0 + $0x38] sm:$0xff]
    %v51 = vld [vmem:[#allocation2] sm:$0xff]
    %v52 = vld [vmem:[#allocation2 + $0x8] sm:$0xff]
    %v53 = vld [vmem:[#allocation2 + $0x10] sm:$0xff]
    %v54 = vld [vmem:[#allocation2 + $0x18] sm:$0xff]
    %v55 = vld [vmem:[#allocation3] sm:$0xff]
    %v56 = vld [vmem:[#allocation3 + $0x8] sm:$0xff]
    %v57 = vld [vmem:[#allocation3 + $0x10] sm:$0xff]
    %v58 = vld [vmem:[#allocation3 + $0x18] sm:$0xff]
    %v59 = vld [vmem:[#allocation3 + $0x20] sm:$0xff]
    %v60 = vld [vmem:[#allocation3 + $0x28] sm:$0xff]
    %v61 = vld [vmem:[#allocation3 + $0x30] sm:$0xff]
    %v62 = vld [vmem:[#allocation3 + $0x38] sm:$0xff]
    %v63 = vld [vmem:[#allocation3 + $0x40] sm:$0xff]
    %v64 = vld [vmem:[#allocation3 + $0x48] sm:$0xff]
    %v65 = vld [vmem:[#allocation3 + $0x50] sm:$0xff]
    %v66 = vld [vmem:[#allocation3 + $0x58] sm:$0xff]
    %v67 = vld [vmem:[#allocation3 + $0x60] sm:$0xff]
    %v68 = vld [vmem:[#allocation3 + $0x68] sm:$0xff]
    %v69 = vld [vmem:[#allocation3 + $0x70] sm:$0xff]
    %v70 = vld [vmem:[#allocation3 + $0x78] sm:$0xff]
    %v71 = vld [vmem:[#allocation3 + $0x80] sm:$0xff]
    %v72 = vld [vmem:[#allocation3 + $0x88] sm:$0xff]
    %v73 = vld [vmem:[#allocation3 + $0x90] sm:$0xff]
    %v74 = vld [vmem:[#allocation3 + $0x98] sm:$0xff]
    %v75 = vld [vmem:[#allocation3 + $0xa0] sm:$0xff]
    %v76 = vld [vmem:[#allocation3 + $0xa8] sm:$0xff]
    %v77 = vld [vmem:[#allocation3 + $0xb0] sm:$0xff]
    %v78 = vld [vmem:[#allocation3 + $0xb8] sm:$0xff]
    %v79 = vld [vmem:[#allocation3 + $0xc0] sm:$0xff]
    %v80 = vld [vmem:[#allocation3 + $0xc8] sm:$0xff]
    %v81 = vld [vmem:[#allocation3 + $0xd0] sm:$0xff]
    %v82 = vld [vmem:[#allocation3 + $0xd8] sm:$0xff]
    %v83 = vld [vmem:[#allocation3 + $0xe0] sm:$0xff]
    %v84 = vld [vmem:[#allocation3 + $0xe8] sm:$0xff]
    %v85 = vld [vmem:[#allocation3 + $0xf0] sm:$0xff]
    %v86 = vld [vmem:[#allocation3 + $0xf8] sm:$0xff]
    %v87 = vld [vmem:[#allocation3 + $0x100] sm:$0xff]
    %v88 = vld [vmem:[#allocation3 + $0x108] sm:$0xff]
    %v89 = vld [vmem:[#allocation3 + $0x110] sm:$0xff]
    %v90 = vld [vmem:[#allocation3 + $0x118] sm:$0xff]
    %v91 = vld [vmem:[#allocation3 + $0x120] sm:$0xff]
    %v92 = vld [vmem:[#allocation3 + $0x128] sm:$0xff]
    %v93 = vld [vmem:[#allocation3 + $0x130] sm:$0xff]
    %v94 = vld [vmem:[#allocation3 + $0x138] sm:$0xff]
    %v95 = vld [vmem:[#allocation3 + $0x140] sm:$0xff]
    %v96 = vld [vmem:[#allocation3 + $0x148] sm:$0xff]
    %v97 = vld [vmem:[#allocation3 + $0x150] sm:$0xff]
    %v98 = vld [vmem:[#allocation3 + $0x158] sm:$0xff]
    %v99 = vld [vmem:[#allocation3 + $0x160] sm:$0xff]
    %v100 = vld [vmem:[#allocation3 + $0x168] sm:$0xff]
    %v101 = vld [vmem:[#allocation3 + $0x170] sm:$0xff]
    %v102 = vld [vmem:[#allocation3 + $0x178] sm:$0xff]
    %v103 = vld [vmem:[#allocation3 + $0x180] sm:$0xff]
    %v104 = vld [vmem:[#allocation3 + $0x188] sm:$0xff]
    %v105 = vld [vmem:[#allocation3 + $0x190] sm:$0xff]
    %v106 = vld [vmem:[#allocation3 + $0x198] sm:$0xff]
    %v107 = vld [vmem:[#allocation3 + $0x1a0] sm:$0xff]
    %v108 = vld [vmem:[#allocation3 + $0x1a8] sm:$0xff]
    %v109 = vld [vmem:[#allocation3 + $0x1b0] sm:$0xff]
    %v110 = vld [vmem:[#allocation3 + $0x1b8] sm:$0xff]
    %v111 = vld [vmem:[#allocation3 + $0x1c0] sm:$0xff]
    %v112 = vld [vmem:[#allocation3 + $0x1c8] sm:$0xff]
    %v113 = vld [vmem:[#allocation3 + $0x1d0] sm:$0xff]
    %v114 = vld [vmem:[#allocation3 + $0x1d8] sm:$0xff]
    %v115 = vld [vmem:[#allocation3 + $0x1e0] sm:$0xff]
    %v116 = vld [vmem:[#allocation3 + $0x1e8] sm:$0xff]
    %v117 = vld [vmem:[#allocation3 + $0x1f0] sm:$0xff]
    %v118 = vld [vmem:[#allocation3 + $0x1f8] sm:$0xff]
    %v119 = vld [vmem:[#allocation3 + $0x200] sm:$0xff]
    %v120 = vld [vmem:[#allocation3 + $0x208] sm:$0xff]
    %v121 = vld [vmem:[#allocation3 + $0x210] sm:$0xff]
    %v122 = vld [vmem:[#allocation3 + $0x218] sm:$0xff]
    %v123 = vld [vmem:[#allocation3 + $0x220] sm:$0xff]
    %v124 = vld [vmem:[#allocation3 + $0x228] sm:$0xff]
    %v125 = vld [vmem:[#allocation3 + $0x230] sm:$0xff]
    %v126 = vld [vmem:[#allocation3 + $0x238] sm:$0xff]
    %v127 = vld [vmem:[#allocation3 + $0x240] sm:$0xff]
    %v128 = vld [vmem:[#allocation3 + $0x248] sm:$0xff]
    %v129 = vld [vmem:[#allocation3 + $0x250] sm:$0xff]
    %v130 = vld [vmem:[#allocation3 + $0x258] sm:$0xff]
    %v131 = vld [vmem:[#allocation3 + $0x260] sm:$0xff]
    %v132 = vld [vmem:[#allocation3 + $0x268] sm:$0xff]
    %v133 = vld [vmem:[#allocation3 + $0x270] sm:$0xff]
    %v134 = vld [vmem:[#allocation3 + $0x278] sm:$0xff]
    %v135 = vld [vmem:[#allocation3 + $0x280] sm:$0xff]
    %v136 = vld [vmem:[#allocation3 + $0x288] sm:$0xff]
    %v137 = vld [vmem:[#allocation3 + $0x290] sm:$0xff]
    %v138 = vld [vmem:[#allocation3 + $0x298] sm:$0xff]
    %v139 = vld [vmem:[#allocation3 + $0x2a0] sm:$0xff]
    %v140 = vld [vmem:[#allocation3 + $0x2a8] sm:$0xff]
    %v141 = vld [vmem:[#allocation3 + $0x2b0] sm:$0xff]
    %v142 = vld [vmem:[#allocation3 + $0x2b8] sm:$0xff]
    %v143 = vld [vmem:[#allocation3 + $0x2c0] sm:$0xff]
    %v144 = vld [vmem:[#allocation3 + $0x2c8] sm:$0xff]
    %v145 = vld [vmem:[#allocation3 + $0x2d0] sm:$0xff]
    %v146 = vld [vmem:[#allocation3 + $0x2d8] sm:$0xff]
    %v147 = vld [vmem:[#allocation3 + $0x2e0] sm:$0xff]
    %v148 = vld [vmem:[#allocation3 + $0x2e8] sm:$0xff]
    %v149 = vld [vmem:[#allocation3 + $0x2f0] sm:$0xff]
    %v150 = vld [vmem:[#allocation3 + $0x2f8] sm:$0xff]
    %v151 = vld [vmem:[#allocation3 + $0x300] sm:$0xff]
    %v152 = vld [vmem:[#allocation3 + $0x308] sm:$0xff]
    %v153 = vld [vmem:[#allocation3 + $0x310] sm:$0xff]
    %v154 = vld [vmem:[#allocation3 + $0x318] sm:$0xff]
    %v155 = vld [vmem:[#allocation3 + $0x320] sm:$0xff]
    %v156 = vld [vmem:[#allocation3 + $0x328] sm:$0xff]
    %v157 = vld [vmem:[#allocation3 + $0x330] sm:$0xff]
    %v158 = vld [vmem:[#allocation3 + $0x338] sm:$0xff]
    %v159 = vld [vmem:[#allocation3 + $0x340] sm:$0xff]
    %v160 = vld [vmem:[#allocation3 + $0x348] sm:$0xff]
    %v161 = vld [vmem:[#allocation3 + $0x350] sm:$0xff]
    %v162 = vld [vmem:[#allocation3 + $0x358] sm:$0xff]
    %v163 = vld [vmem:[#allocation3 + $0x360] sm:$0xff]
    %v164 = vld [vmem:[#allocation3 + $0x368] sm:$0xff]
    %v165 = vld [vmem:[#allocation3 + $0x370] sm:$0xff]
    %v166 = vld [vmem:[#allocation3 + $0x378] sm:$0xff]
    %v167 = vld [vmem:[#allocation3 + $0x380] sm:$0xff]
    %v168 = vld [vmem:[#allocation3 + $0x388] sm:$0xff]
    %v169 = vld [vmem:[#allocation3 + $0x390] sm:$0xff]
    %v170 = vld [vmem:[#allocation3 + $0x398] sm:$0xff]
    %v171 = vld [vmem:[#allocation3 + $0x3a0] sm:$0xff]
    %v172 = vld [vmem:[#allocation3 + $0x3a8] sm:$0xff]
    %v173 = vld [vmem:[#allocation3 + $0x3b0] sm:$0xff]
    %v174 = vld [vmem:[#allocation3 + $0x3b8] sm:$0xff]
    %v175 = vld [vmem:[#allocation3 + $0x3c0] sm:$0xff]
    %v176 = vld [vmem:[#allocation3 + $0x3c8] sm:$0xff]
    %v177 = vld [vmem:[#allocation3 + $0x3d0] sm:$0xff]
    %v178 = vld [vmem:[#allocation3 + $0x3d8] sm:$0xff]
    %v179 = vld [vmem:[#allocation3 + $0x3e0] sm:$0xff]
    %v180 = vld [vmem:[#allocation3 + $0x3e8] sm:$0xff]
    %v181 = vld [vmem:[#allocation3 + $0x3f0] sm:$0xff]
    %v182 = vld [vmem:[#allocation3 + $0x3f8] sm:$0xff]
    %v191 = vunpack.c.l.b16 %v43
    %v192 = vunpack.c.h.b16 %v43
    %v193 = vunpack.c.l.b16 %v44
    %v194 = vunpack.c.h.b16 %v44
    %v195 = vunpack.c.l.b16 %v45
    %v196 = vunpack.c.h.b16 %v45
    %v197 = vunpack.c.l.b16 %v46
    %v198 = vunpack.c.h.b16 %v46
    %v199 = vunpack.c.l.b16 %v47
    %v200 = vunpack.c.h.b16 %v47
    %v201 = vunpack.c.l.b16 %v48
    %v202 = vunpack.c.h.b16 %v48
    %v203 = vunpack.c.l.b16 %v49
    %v204 = vunpack.c.h.b16 %v49
    %v205 = vunpack.c.l.b16 %v50
    %v206 = vunpack.c.h.b16 %v50
    %v207 = vpack.c.b16 %v199, %v191
    %v208 = vpack.c.b16 %v200, %v192
    %v209 = vpack.c.b16 %v201, %v193
    %v210 = vpack.c.b16 %v202, %v194
    %v211 = vpack.c.b16 %v203, %v195
    %v212 = vpack.c.b16 %v204, %v196
    %v213 = vpack.c.b16 %v205, %v197
    %v214 = vpack.c.b16 %v206, %v198
    %v351 = vunpack.c.l.b16 %v55
    %v352 = vunpack.c.h.b16 %v55
    %v353 = vunpack.c.l.b16 %v56
    %v354 = vunpack.c.h.b16 %v56
    %v355 = vunpack.c.l.b16 %v57
    %v356 = vunpack.c.h.b16 %v57
    %v357 = vunpack.c.l.b16 %v58
    %v358 = vunpack.c.h.b16 %v58
    %v359 = vunpack.c.l.b16 %v59
    %v360 = vunpack.c.h.b16 %v59
    %v361 = vunpack.c.l.b16 %v60
    %v362 = vunpack.c.h.b16 %v60
    %v363 = vunpack.c.l.b16 %v61
    %v364 = vunpack.c.h.b16 %v61
    %v365 = vunpack.c.l.b16 %v62
    %v366 = vunpack.c.h.b16 %v62
    %v367 = vunpack.c.l.b16 %v63
    %v368 = vunpack.c.h.b16 %v63
    %v369 = vunpack.c.l.b16 %v64
    %v370 = vunpack.c.h.b16 %v64
    %v371 = vunpack.c.l.b16 %v65
    %v372 = vunpack.c.h.b16 %v65
    %v373 = vunpack.c.l.b16 %v66
    %v374 = vunpack.c.h.b16 %v66
    %v375 = vunpack.c.l.b16 %v67
    %v376 = vunpack.c.h.b16 %v67
    %v377 = vunpack.c.l.b16 %v68
    %v378 = vunpack.c.h.b16 %v68
    %v379 = vunpack.c.l.b16 %v69
    %v380 = vunpack.c.h.b16 %v69
    %v381 = vunpack.c.l.b16 %v70
    %v382 = vunpack.c.h.b16 %v70
    %v383 = vunpack.c.l.b16 %v71
    %v384 = vunpack.c.h.b16 %v71
    %v385 = vunpack.c.l.b16 %v72
    %v386 = vunpack.c.h.b16 %v72
    %v387 = vunpack.c.l.b16 %v73
    %v388 = vunpack.c.h.b16 %v73
    %v389 = vunpack.c.l.b16 %v74
    %v390 = vunpack.c.h.b16 %v74
    %v391 = vunpack.c.l.b16 %v75
    %v392 = vunpack.c.h.b16 %v75
    %v393 = vunpack.c.l.b16 %v76
    %v394 = vunpack.c.h.b16 %v76
    %v395 = vunpack.c.l.b16 %v77
    %v396 = vunpack.c.h.b16 %v77
    %v397 = vunpack.c.l.b16 %v78
    %v398 = vunpack.c.h.b16 %v78
    %v399 = vunpack.c.l.b16 %v79
    %v400 = vunpack.c.h.b16 %v79
    %v401 = vunpack.c.l.b16 %v80
    %v402 = vunpack.c.h.b16 %v80
    %v403 = vunpack.c.l.b16 %v81
    %v404 = vunpack.c.h.b16 %v81
    %v405 = vunpack.c.l.b16 %v82
    %v406 = vunpack.c.h.b16 %v82
    %v407 = vunpack.c.l.b16 %v83
    %v408 = vunpack.c.h.b16 %v83
    %v409 = vunpack.c.l.b16 %v84
    %v410 = vunpack.c.h.b16 %v84
    %v411 = vunpack.c.l.b16 %v85
    %v412 = vunpack.c.h.b16 %v85
    %v413 = vunpack.c.l.b16 %v86
    %v414 = vunpack.c.h.b16 %v86
    %v415 = vunpack.c.l.b16 %v87
    %v416 = vunpack.c.h.b16 %v87
    %v417 = vunpack.c.l.b16 %v88
    %v418 = vunpack.c.h.b16 %v88
    %v419 = vunpack.c.l.b16 %v89
    %v420 = vunpack.c.h.b16 %v89
    %v421 = vunpack.c.l.b16 %v90
    %v422 = vunpack.c.h.b16 %v90
    %v423 = vunpack.c.l.b16 %v91
    %v424 = vunpack.c.h.b16 %v91
    %v425 = vunpack.c.l.b16 %v92
    %v426 = vunpack.c.h.b16 %v92
    %v427 = vunpack.c.l.b16 %v93
    %v428 = vunpack.c.h.b16 %v93
    %v429 = vunpack.c.l.b16 %v94
    %v430 = vunpack.c.h.b16 %v94
    %v431 = vunpack.c.l.b16 %v95
    %v432 = vunpack.c.h.b16 %v95
    %v433 = vunpack.c.l.b16 %v96
    %v434 = vunpack.c.h.b16 %v96
    %v435 = vunpack.c.l.b16 %v97
    %v436 = vunpack.c.h.b16 %v97
    %v437 = vunpack.c.l.b16 %v98
    %v438 = vunpack.c.h.b16 %v98
    %v439 = vunpack.c.l.b16 %v99
    %v440 = vunpack.c.h.b16 %v99
    %v441 = vunpack.c.l.b16 %v100
    %v442 = vunpack.c.h.b16 %v100
    %v443 = vunpack.c.l.b16 %v101
    %v444 = vunpack.c.h.b16 %v101
    %v445 = vunpack.c.l.b16 %v102
    %v446 = vunpack.c.h.b16 %v102
    %v447 = vunpack.c.l.b16 %v103
    %v448 = vunpack.c.h.b16 %v103
    %v449 = vunpack.c.l.b16 %v104
    %v450 = vunpack.c.h.b16 %v104
    %v451 = vunpack.c.l.b16 %v105
    %v452 = vunpack.c.h.b16 %v105
    %v453 = vunpack.c.l.b16 %v106
    %v454 = vunpack.c.h.b16 %v106
    %v455 = vunpack.c.l.b16 %v107
    %v456 = vunpack.c.h.b16 %v107
    %v457 = vunpack.c.l.b16 %v108
    %v458 = vunpack.c.h.b16 %v108
    %v459 = vunpack.c.l.b16 %v109
    %v460 = vunpack.c.h.b16 %v109
    %v461 = vunpack.c.l.b16 %v110
    %v462 = vunpack.c.h.b16 %v110
    %v463 = vunpack.c.l.b16 %v111
    %v464 = vunpack.c.h.b16 %v111
    %v465 = vunpack.c.l.b16 %v112
    %v466 = vunpack.c.h.b16 %v112
    %v467 = vunpack.c.l.b16 %v113
    %v468 = vunpack.c.h.b16 %v113
    %v469 = vunpack.c.l.b16 %v114
    %v470 = vunpack.c.h.b16 %v114
    %v471 = vunpack.c.l.b16 %v115
    %v472 = vunpack.c.h.b16 %v115
    %v473 = vunpack.c.l.b16 %v116
    %v474 = vunpack.c.h.b16 %v116
    %v475 = vunpack.c.l.b16 %v117
    %v476 = vunpack.c.h.b16 %v117
    %v477 = vunpack.c.l.b16 %v118
    %v478 = vunpack.c.h.b16 %v118
    %v479 = vunpack.c.l.b16 %v119
    %v480 = vunpack.c.h.b16 %v119
    %v481 = vunpack.c.l.b16 %v120
    %v482 = vunpack.c.h.b16 %v120
    %v483 = vunpack.c.l.b16 %v121
    %v484 = vunpack.c.h.b16 %v121
    %v485 = vunpack.c.l.b16 %v122
    %v486 = vunpack.c.h.b16 %v122
    %v487 = vunpack.c.l.b16 %v123
    %v488 = vunpack.c.h.b16 %v123
    %v489 = vunpack.c.l.b16 %v124
    %v490 = vunpack.c.h.b16 %v124
    %v491 = vunpack.c.l.b16 %v125
    %v492 = vunpack.c.h.b16 %v125
    %v493 = vunpack.c.l.b16 %v126
    %v494 = vunpack.c.h.b16 %v126
    %v495 = vunpack.c.l.b16 %v127
    %v496 = vunpack.c.h.b16 %v127
    %v497 = vunpack.c.l.b16 %v128
    %v498 = vunpack.c.h.b16 %v128
    %v499 = vunpack.c.l.b16 %v129
    %v500 = vunpack.c.h.b16 %v129
    %v501 = vunpack.c.l.b16 %v130
    %v502 = vunpack.c.h.b16 %v130
    %v503 = vunpack.c.l.b16 %v131
    %v504 = vunpack.c.h.b16 %v131
    %v505 = vunpack.c.l.b16 %v132
    %v506 = vunpack.c.h.b16 %v132
    %v507 = vunpack.c.l.b16 %v133
    %v508 = vunpack.c.h.b16 %v133
    %v509 = vunpack.c.l.b16 %v134
    %v510 = vunpack.c.h.b16 %v134
    %v511 = vunpack.c.l.b16 %v135
    %v512 = vunpack.c.h.b16 %v135
    %v513 = vunpack.c.l.b16 %v136
    %v514 = vunpack.c.h.b16 %v136
    %v515 = vunpack.c.l.b16 %v137
    %v516 = vunpack.c.h.b16 %v137
    %v517 = vunpack.c.l.b16 %v138
    %v518 = vunpack.c.h.b16 %v138
    %v519 = vunpack.c.l.b16 %v139
    %v520 = vunpack.c.h.b16 %v139
    %v521 = vunpack.c.l.b16 %v140
    %v522 = vunpack.c.h.b16 %v140
    %v523 = vunpack.c.l.b16 %v141
    %v524 = vunpack.c.h.b16 %v141
    %v525 = vunpack.c.l.b16 %v142
    %v526 = vunpack.c.h.b16 %v142
    %v527 = vunpack.c.l.b16 %v143
    %v528 = vunpack.c.h.b16 %v143
    %v529 = vunpack.c.l.b16 %v144
    %v530 = vunpack.c.h.b16 %v144
    %v531 = vunpack.c.l.b16 %v145
    %v532 = vunpack.c.h.b16 %v145
    %v533 = vunpack.c.l.b16 %v146
    %v534 = vunpack.c.h.b16 %v146
    %v535 = vunpack.c.l.b16 %v147
    %v536 = vunpack.c.h.b16 %v147
    %v537 = vunpack.c.l.b16 %v148
    %v538 = vunpack.c.h.b16 %v148
    %v539 = vunpack.c.l.b16 %v149
    %v540 = vunpack.c.h.b16 %v149
    %v541 = vunpack.c.l.b16 %v150
    %v542 = vunpack.c.h.b16 %v150
    %v543 = vunpack.c.l.b16 %v151
    %v544 = vunpack.c.h.b16 %v151
    %v545 = vunpack.c.l.b16 %v152
    %v546 = vunpack.c.h.b16 %v152
    %v547 = vunpack.c.l.b16 %v153
    %v548 = vunpack.c.h.b16 %v153
    %v549 = vunpack.c.l.b16 %v154
    %v550 = vunpack.c.h.b16 %v154
    %v551 = vunpack.c.l.b16 %v155
    %v552 = vunpack.c.h.b16 %v155
    %v553 = vunpack.c.l.b16 %v156
    %v554 = vunpack.c.h.b16 %v156
    %v555 = vunpack.c.l.b16 %v157
    %v556 = vunpack.c.h.b16 %v157
    %v557 = vunpack.c.l.b16 %v158
    %v558 = vunpack.c.h.b16 %v158
    %v559 = vunpack.c.l.b16 %v159
    %v560 = vunpack.c.h.b16 %v159
    %v561 = vunpack.c.l.b16 %v160
    %v562 = vunpack.c.h.b16 %v160
    %v563 = vunpack.c.l.b16 %v161
    %v564 = vunpack.c.h.b16 %v161
    %v565 = vunpack.c.l.b16 %v162
    %v566 = vunpack.c.h.b16 %v162
    %v567 = vunpack.c.l.b16 %v163
    %v568 = vunpack.c.h.b16 %v163
    %v569 = vunpack.c.l.b16 %v164
    %v570 = vunpack.c.h.b16 %v164
    %v571 = vunpack.c.l.b16 %v165
    %v572 = vunpack.c.h.b16 %v165
    %v573 = vunpack.c.l.b16 %v166
    %v574 = vunpack.c.h.b16 %v166
    %v575 = vunpack.c.l.b16 %v167
    %v576 = vunpack.c.h.b16 %v167
    %v577 = vunpack.c.l.b16 %v168
    %v578 = vunpack.c.h.b16 %v168
    %v579 = vunpack.c.l.b16 %v169
    %v580 = vunpack.c.h.b16 %v169
    %v581 = vunpack.c.l.b16 %v170
    %v582 = vunpack.c.h.b16 %v170
    %v583 = vunpack.c.l.b16 %v171
    %v584 = vunpack.c.h.b16 %v171
    %v585 = vunpack.c.l.b16 %v172
    %v586 = vunpack.c.h.b16 %v172
    %v587 = vunpack.c.l.b16 %v173
    %v588 = vunpack.c.h.b16 %v173
    %v589 = vunpack.c.l.b16 %v174
    %v590 = vunpack.c.h.b16 %v174
    %v591 = vunpack.c.l.b16 %v175
    %v592 = vunpack.c.h.b16 %v175
    %v593 = vunpack.c.l.b16 %v176
    %v594 = vunpack.c.h.b16 %v176
    %v595 = vunpack.c.l.b16 %v177
    %v596 = vunpack.c.h.b16 %v177
    %v597 = vunpack.c.l.b16 %v178
    %v598 = vunpack.c.h.b16 %v178
    %v599 = vunpack.c.l.b16 %v179
    %v600 = vunpack.c.h.b16 %v179
    %v601 = vunpack.c.l.b16 %v180
    %v602 = vunpack.c.h.b16 %v180
    %v603 = vunpack.c.l.b16 %v181
    %v604 = vunpack.c.h.b16 %v181
    %v605 = vunpack.c.l.b16 %v182
    %v606 = vunpack.c.h.b16 %v182
    %v607 = vpack.c.b16 %v353, %v351
    %v608 = vpack.c.b16 %v354, %v352
    %v609 = vpack.c.b16 %v357, %v355
    %v610 = vpack.c.b16 %v358, %v356
    %v611 = vpack.c.b16 %v361, %v359
    %v612 = vpack.c.b16 %v362, %v360
    %v613 = vpack.c.b16 %v365, %v363
    %v614 = vpack.c.b16 %v366, %v364
    %v615 = vpack.c.b16 %v369, %v367
    %v616 = vpack.c.b16 %v370, %v368
    %v617 = vpack.c.b16 %v373, %v371
    %v618 = vpack.c.b16 %v374, %v372
    %v619 = vpack.c.b16 %v377, %v375
    %v620 = vpack.c.b16 %v378, %v376
    %v621 = vpack.c.b16 %v381, %v379
    %v622 = vpack.c.b16 %v382, %v380
    %v623 = vpack.c.b16 %v385, %v383
    %v624 = vpack.c.b16 %v386, %v384
    %v625 = vpack.c.b16 %v389, %v387
    %v626 = vpack.c.b16 %v390, %v388
    %v627 = vpack.c.b16 %v393, %v391
    %v628 = vpack.c.b16 %v394, %v392
    %v629 = vpack.c.b16 %v397, %v395
    %v630 = vpack.c.b16 %v398, %v396
    %v631 = vpack.c.b16 %v401, %v399
    %v632 = vpack.c.b16 %v402, %v400
    %v633 = vpack.c.b16 %v405, %v403
    %v634 = vpack.c.b16 %v406, %v404
    %v635 = vpack.c.b16 %v409, %v407
    %v636 = vpack.c.b16 %v410, %v408
    %v637 = vpack.c.b16 %v413, %v411
    %v638 = vpack.c.b16 %v414, %v412
    %v639 = vpack.c.b16 %v417, %v415
    %v640 = vpack.c.b16 %v418, %v416
    %v641 = vpack.c.b16 %v421, %v419
    %v642 = vpack.c.b16 %v422, %v420
    %v643 = vpack.c.b16 %v425, %v423
    %v644 = vpack.c.b16 %v426, %v424
    %v645 = vpack.c.b16 %v429, %v427
    %v646 = vpack.c.b16 %v430, %v428
    %v647 = vpack.c.b16 %v433, %v431
    %v648 = vpack.c.b16 %v434, %v432
    %v649 = vpack.c.b16 %v437, %v435
    %v650 = vpack.c.b16 %v438, %v436
    %v651 = vpack.c.b16 %v441, %v439
    %v652 = vpack.c.b16 %v442, %v440
    %v653 = vpack.c.b16 %v445, %v443
    %v654 = vpack.c.b16 %v446, %v444
    %v655 = vpack.c.b16 %v449, %v447
    %v656 = vpack.c.b16 %v450, %v448
    %v657 = vpack.c.b16 %v453, %v451
    %v658 = vpack.c.b16 %v454, %v452
    %v659 = vpack.c.b16 %v457, %v455
    %v660 = vpack.c.b16 %v458, %v456
    %v661 = vpack.c.b16 %v461, %v459
    %v662 = vpack.c.b16 %v462, %v460
    %v663 = vpack.c.b16 %v465, %v463
    %v664 = vpack.c.b16 %v466, %v464
    %v665 = vpack.c.b16 %v469, %v467
    %v666 = vpack.c.b16 %v470, %v468
    %v667 = vpack.c.b16 %v473, %v471
    %v668 = vpack.c.b16 %v474, %v472
    %v669 = vpack.c.b16 %v477, %v475
    %v670 = vpack.c.b16 %v478, %v476
    %v671 = vpack.c.b16 %v481, %v479
    %v672 = vpack.c.b16 %v482, %v480
    %v673 = vpack.c.b16 %v485, %v483
    %v674 = vpack.c.b16 %v486, %v484
    %v675 = vpack.c.b16 %v489, %v487
    %v676 = vpack.c.b16 %v490, %v488
    %v677 = vpack.c.b16 %v493, %v491
    %v678 = vpack.c.b16 %v494, %v492
    %v679 = vpack.c.b16 %v497, %v495
    %v680 = vpack.c.b16 %v498, %v496
    %v681 = vpack.c.b16 %v501, %v499
    %v682 = vpack.c.b16 %v502, %v500
    %v683 = vpack.c.b16 %v505, %v503
    %v684 = vpack.c.b16 %v506, %v504
    %v685 = vpack.c.b16 %v509, %v507
    %v686 = vpack.c.b16 %v510, %v508
    %v687 = vpack.c.b16 %v513, %v511
    %v688 = vpack.c.b16 %v514, %v512
    %v689 = vpack.c.b16 %v517, %v515
    %v690 = vpack.c.b16 %v518, %v516
    %v691 = vpack.c.b16 %v521, %v519
    %v692 = vpack.c.b16 %v522, %v520
    %v693 = vpack.c.b16 %v525, %v523
    %v694 = vpack.c.b16 %v526, %v524
    %v695 = vpack.c.b16 %v529, %v527
    %v696 = vpack.c.b16 %v530, %v528
    %v697 = vpack.c.b16 %v533, %v531
    %v698 = vpack.c.b16 %v534, %v532
    %v699 = vpack.c.b16 %v537, %v535
    %v700 = vpack.c.b16 %v538, %v536
    %v701 = vpack.c.b16 %v541, %v539
    %v702 = vpack.c.b16 %v542, %v540
    %v703 = vpack.c.b16 %v545, %v543
    %v704 = vpack.c.b16 %v546, %v544
    %v705 = vpack.c.b16 %v549, %v547
    %v706 = vpack.c.b16 %v550, %v548
    %v707 = vpack.c.b16 %v553, %v551
    %v708 = vpack.c.b16 %v554, %v552
    %v709 = vpack.c.b16 %v557, %v555
    %v710 = vpack.c.b16 %v558, %v556
    %v711 = vpack.c.b16 %v561, %v559
    %v712 = vpack.c.b16 %v562, %v560
    %v713 = vpack.c.b16 %v565, %v563
    %v714 = vpack.c.b16 %v566, %v564
    %v715 = vpack.c.b16 %v569, %v567
    %v716 = vpack.c.b16 %v570, %v568
    %v717 = vpack.c.b16 %v573, %v571
    %v718 = vpack.c.b16 %v574, %v572
    %v719 = vpack.c.b16 %v577, %v575
    %v720 = vpack.c.b16 %v578, %v576
    %v721 = vpack.c.b16 %v581, %v579
    %v722 = vpack.c.b16 %v582, %v580
    %v723 = vpack.c.b16 %v585, %v583
    %v724 = vpack.c.b16 %v586, %v584
    %v725 = vpack.c.b16 %v589, %v587
    %v726 = vpack.c.b16 %v590, %v588
    %v727 = vpack.c.b16 %v593, %v591
    %v728 = vpack.c.b16 %v594, %v592
    %v729 = vpack.c.b16 %v597, %v595
    %v730 = vpack.c.b16 %v598, %v596
    %v731 = vpack.c.b16 %v601, %v599
    %v732 = vpack.c.b16 %v602, %v600
    %v733 = vpack.c.b16 %v605, %v603
    %v734 = vpack.c.b16 %v606, %v604
    %863 = vmatprep.subr.bf16.mxu0 %v608
    %864 = vmatpush1.bf16.msra.mxu0 %v607
    %865 = vmatprep.subr.bf16.mxu0 %v610
    %866 = vmatpush1.bf16.msra.mxu0 %v609
    %867 = vmatprep.subr.bf16.mxu0 %v612
    %868 = vmatpush1.bf16.msra.mxu0 %v611
    %869 = vmatprep.subr.bf16.mxu0 %v614
    %870 = vmatpush1.bf16.msra.mxu0 %v613
    %871 = vmatprep.subr.bf16.mxu0 %v616
    %872 = vmatpush1.bf16.msra.mxu0 %v615
    %873 = vmatprep.subr.bf16.mxu0 %v618
    %874 = vmatpush1.bf16.msra.mxu0 %v617
    %875 = vmatprep.subr.bf16.mxu0 %v620
    %876 = vmatpush1.bf16.msra.mxu0 %v619
    %877 = vmatprep.subr.bf16.mxu0 %v622
    %878 = vmatpush1.bf16.msra.mxu0 %v621
    %879 = vmatprep.subr.bf16.mxu0 %v624
    %880 = vmatpush1.bf16.msra.mxu0 %v623
    %881 = vmatprep.subr.bf16.mxu0 %v626
    %882 = vmatpush1.bf16.msra.mxu0 %v625
    %883 = vmatprep.subr.bf16.mxu0 %v628
    %884 = vmatpush1.bf16.msra.mxu0 %v627
    %885 = vmatprep.subr.bf16.mxu0 %v630
    %886 = vmatpush1.bf16.msra.mxu0 %v629
    %887 = vmatprep.subr.bf16.mxu0 %v632
    %888 = vmatpush1.bf16.msra.mxu0 %v631
    %889 = vmatprep.subr.bf16.mxu0 %v634
    %890 = vmatpush1.bf16.msra.mxu0 %v633
    %891 = vmatprep.subr.bf16.mxu0 %v636
    %892 = vmatpush1.bf16.msra.mxu0 %v635
    %893 = vmatprep.subr.bf16.mxu0 %v638
    %894 = vmatpush1.bf16.msra.mxu0 %v637
    %895 = vmatprep.mubr.bf16.mxu0 %v208
    %896 = vmatmul.mubr.bf16.gmra.mrb[0].mxu0 %v207
    %v897 = vpop.f32.mrb[0].mxu0
    %v898 = vadd.f32 0.0, %v897
    %v899 = vpop.f32.mrb[0].mxu0
    %v900 = vadd.f32 0.0, %v899
    %v901 = vpop.f32.mrb[0].mxu0
    %v902 = vadd.f32 0.0, %v901
    %v903 = vpop.f32.mrb[0].mxu0
    %v904 = vadd.f32 0.0, %v903
    %905 = vdwg.mxu0
    %906 = vmatprep.subr.bf16.mxu0 %v640
    %907 = vmatpush1.bf16.msra.mxu0 %v639
    %908 = vmatprep.subr.bf16.mxu0 %v642
    %909 = vmatpush1.bf16.msra.mxu0 %v641
    %910 = vmatprep.subr.bf16.mxu0 %v644
    %911 = vmatpush1.bf16.msra.mxu0 %v643
    %912 = vmatprep.subr.bf16.mxu0 %v646
    %913 = vmatpush1.bf16.msra.mxu0 %v645
    %914 = vmatprep.subr.bf16.mxu0 %v648
    %915 = vmatpush1.bf16.msra.mxu0 %v647
    %916 = vmatprep.subr.bf16.mxu0 %v650
    %917 = vmatpush1.bf16.msra.mxu0 %v649
    %918 = vmatprep.subr.bf16.mxu0 %v652
    %919 = vmatpush1.bf16.msra.mxu0 %v651
    %920 = vmatprep.subr.bf16.mxu0 %v654
    %921 = vmatpush1.bf16.msra.mxu0 %v653
    %922 = vmatprep.subr.bf16.mxu0 %v656
    %923 = vmatpush1.bf16.msra.mxu0 %v655
    %924 = vmatprep.subr.bf16.mxu0 %v658
    %925 = vmatpush1.bf16.msra.mxu0 %v657
    %926 = vmatprep.subr.bf16.mxu0 %v660
    %927 = vmatpush1.bf16.msra.mxu0 %v659
    %928 = vmatprep.subr.bf16.mxu0 %v662
    %929 = vmatpush1.bf16.msra.mxu0 %v661
    %930 = vmatprep.subr.bf16.mxu0 %v664
    %931 = vmatpush1.bf16.msra.mxu0 %v663
    %932 = vmatprep.subr.bf16.mxu0 %v666
    %933 = vmatpush1.bf16.msra.mxu0 %v665
    %934 = vmatprep.subr.bf16.mxu0 %v668
    %935 = vmatpush1.bf16.msra.mxu0 %v667
    %936 = vmatprep.subr.bf16.mxu0 %v670
    %937 = vmatpush1.bf16.msra.mxu0 %v669
    %938 = vmatprep.mubr.bf16.mxu0 %v210
    %939 = vmatmul.mubr.bf16.gmra.mrb[0].mxu0 %v209
    %v940 = vpop.f32.mrb[0].mxu0
    %v941 = vadd.f32 %v898, %v940
    %v942 = vpop.f32.mrb[0].mxu0
    %v943 = vadd.f32 %v900, %v942
    %v944 = vpop.f32.mrb[0].mxu0
    %v945 = vadd.f32 %v902, %v944
    %v946 = vpop.f32.mrb[0].mxu0
    %v947 = vadd.f32 %v904, %v946
    %948 = vdwg.mxu0
    %949 = vmatprep.subr.bf16.mxu0 %v672
    %950 = vmatpush1.bf16.msra.mxu0 %v671
    %951 = vmatprep.subr.bf16.mxu0 %v674
    %952 = vmatpush1.bf16.msra.mxu0 %v673
    %953 = vmatprep.subr.bf16.mxu0 %v676
    %954 = vmatpush1.bf16.msra.mxu0 %v675
    %955 = vmatprep.subr.bf16.mxu0 %v678
    %956 = vmatpush1.bf16.msra.mxu0 %v677
    %957 = vmatprep.subr.bf16.mxu0 %v680
    %958 = vmatpush1.bf16.msra.mxu0 %v679
    %959 = vmatprep.subr.bf16.mxu0 %v682
    %960 = vmatpush1.bf16.msra.mxu0 %v681
    %961 = vmatprep.subr.bf16.mxu0 %v684
    %962 = vmatpush1.bf16.msra.mxu0 %v683
    %963 = vmatprep.subr.bf16.mxu0 %v686
    %964 = vmatpush1.bf16.msra.mxu0 %v685
    %965 = vmatprep.subr.bf16.mxu0 %v688
    %966 = vmatpush1.bf16.msra.mxu0 %v687
    %967 = vmatprep.subr.bf16.mxu0 %v690
    %968 = vmatpush1.bf16.msra.mxu0 %v689
    %969 = vmatprep.subr.bf16.mxu0 %v692
    %970 = vmatpush1.bf16.msra.mxu0 %v691
    %971 = vmatprep.subr.bf16.mxu0 %v694
    %972 = vmatpush1.bf16.msra.mxu0 %v693
    %973 = vmatprep.subr.bf16.mxu0 %v696
    %974 = vmatpush1.bf16.msra.mxu0 %v695
    %975 = vmatprep.subr.bf16.mxu0 %v698
    %976 = vmatpush1.bf16.msra.mxu0 %v697
    %977 = vmatprep.subr.bf16.mxu0 %v700
    %978 = vmatpush1.bf16.msra.mxu0 %v699
    %979 = vmatprep.subr.bf16.mxu0 %v702
    %980 = vmatpush1.bf16.msra.mxu0 %v701
    %981 = vmatprep.mubr.bf16.mxu0 %v212
    %982 = vmatmul.mubr.bf16.gmra.mrb[0].mxu0 %v211
    %v983 = vpop.f32.mrb[0].mxu0
    %v984 = vadd.f32 %v941, %v983
    %v985 = vpop.f32.mrb[0].mxu0
    %v986 = vadd.f32 %v943, %v985
    %v987 = vpop.f32.mrb[0].mxu0
    %v988 = vadd.f32 %v945, %v987
    %v989 = vpop.f32.mrb[0].mxu0
    %v990 = vadd.f32 %v947, %v989
    %991 = vdwg.mxu0
    %992 = vmatprep.subr.bf16.mxu0 %v704
    %993 = vmatpush1.bf16.msra.mxu0 %v703
    %994 = vmatprep.subr.bf16.mxu0 %v706
    %995 = vmatpush1.bf16.msra.mxu0 %v705
    %996 = vmatprep.subr.bf16.mxu0 %v708
    %997 = vmatpush1.bf16.msra.mxu0 %v707
    %998 = vmatprep.subr.bf16.mxu0 %v710
    %999 = vmatpush1.bf16.msra.mxu0 %v709
    %1000 = vmatprep.subr.bf16.mxu0 %v712
    %1001 = vmatpush1.bf16.msra.mxu0 %v711
    %1002 = vmatprep.subr.bf16.mxu0 %v714
    %1003 = vmatpush1.bf16.msra.mxu0 %v713
    %1004 = vmatprep.subr.bf16.mxu0 %v716
    %1005 = vmatpush1.bf16.msra.mxu0 %v715
    %1006 = vmatprep.subr.bf16.mxu0 %v718
    %1007 = vmatpush1.bf16.msra.mxu0 %v717
    %1008 = vmatprep.subr.bf16.mxu0 %v720
    %1009 = vmatpush1.bf16.msra.mxu0 %v719
    %1010 = vmatprep.subr.bf16.mxu0 %v722
    %1011 = vmatpush1.bf16.msra.mxu0 %v721
    %1012 = vmatprep.subr.bf16.mxu0 %v724
    %1013 = vmatpush1.bf16.msra.mxu0 %v723
    %1014 = vmatprep.subr.bf16.mxu0 %v726
    %1015 = vmatpush1.bf16.msra.mxu0 %v725
    %1016 = vmatprep.subr.bf16.mxu0 %v728
    %1017 = vmatpush1.bf16.msra.mxu0 %v727
    %1018 = vmatprep.subr.bf16.mxu0 %v730
    %1019 = vmatpush1.bf16.msra.mxu0 %v729
    %1020 = vmatprep.subr.bf16.mxu0 %v732
    %1021 = vmatpush1.bf16.msra.mxu0 %v731
    %1022 = vmatprep.subr.bf16.mxu0 %v734
    %1023 = vmatpush1.bf16.msra.mxu0 %v733
    %1024 = vmatprep.mubr.bf16.mxu0 %v214
    %1025 = vmatmul.mubr.bf16.gmra.mrb[0].mxu0 %v213
    %v1026 = vpop.f32.mrb[0].mxu0
    %v1027 = vadd.f32 %v984, %v1026
    %v1028 = vpop.f32.mrb[0].mxu0
    %v1029 = vadd.f32 %v986, %v1028
    %v1030 = vpop.f32.mrb[0].mxu0
    %v1031 = vadd.f32 %v988, %v1030
    %v1032 = vpop.f32.mrb[0].mxu0
    %v1033 = vadd.f32 %v990, %v1032
    %1034 = vdwg.mxu0
    %v1035 = vadd.f32 %v51, %v1027
    %v1036 = vadd.f32 %v52, %v1029
    %v1037 = vadd.f32 %v53, %v1031
    %v1038 = vadd.f32 %v54, %v1033
    %1039 = vst [vmem:[#allocation2] sm:$0xff] %v1035
    %1040 = vst [vmem:[#allocation2 + $0x8] sm:$0xff] %v1036
    %1041 = vst [vmem:[#allocation2 + $0x10] sm:$0xff] %v1037
    %1042 = vst [vmem:[#allocation2 + $0x18] sm:$0xff] %v1038
    // Predicated region
    $region30: #{triplet_net_forward.1} parent=1 // pred_check
      %p1043 = pneg %p35
    $region31: #{triplet_net_forward.1} parent=1 // pred_check_branch
      %1045 = sbr.rel (%p1043) target = $region33
    $region32: #{triplet_net_forward.1} parent=1 // pred_region
      %v1046 = vld [vmem:[#allocation2] sm:$0xff]
      %v1047 = vld [vmem:[#allocation2 + $0x8] sm:$0xff]
      %v1048 = vld [vmem:[#allocation2 + $0x10] sm:$0xff]
      %v1049 = vld [vmem:[#allocation2 + $0x18] sm:$0xff]
      %v1050 = vld [vmem:[%s2] sm:$0x3]
      %v1052 = vlaneseq
      %v1053 = vshrl.u32 %v1052, 7
      %v1054 = vsub.s32 0, %v1053
      %v1055 = vrot.slane %v1050, %v1054
      %v1056 = vlaneseq
      %v1057 = vshrl.u32 %v1056, 7
      %v1058 = vsub.s32 1, %v1057
      %v1059 = vrot.slane %v1050, %v1058
      %v1062 = vadd.f32 %v1046, %v1055
      %v1063 = vadd.f32 %v1047, %v1059
      %v1064 = vadd.f32 %v1048, %v1055
      %v1065 = vadd.f32 %v1049, %v1059
      %v1066 = vmax.f32 %v1062, 0.0
      %v1067 = vmax.f32 %v1063, 0.0
      %v1068 = vmax.f32 %v1064, 0.0
      %v1069 = vmax.f32 %v1065, 0.0
      %v1070 = vpack.c.bf16 %v1068, %v1066
      %v1071 = vpack.c.bf16 %v1069, %v1067
      %v1072 = vld [vmem:[%s3] sm:$0xf]
      %v1073 = vld [vmem:[%s3 + $0x4] sm:$0xf]
      %v1074 = vld [vmem:[%s3 + $0x8] sm:$0xf]
      %v1075 = vld [vmem:[%s3 + $0xc] sm:$0xf]
      %v1076 = vld [vmem:[%s3 + $0x10] sm:$0xf]
      %v1077 = vld [vmem:[%s3 + $0x14] sm:$0xf]
      %v1078 = vld [vmem:[%s3 + $0x18] sm:$0xf]
      %v1079 = vld [vmem:[%s3 + $0x1c] sm:$0xf]
      %v1080 = vld [vmem:[%s3 + $0x20] sm:$0xf]
      %v1081 = vld [vmem:[%s3 + $0x24] sm:$0xf]
      %v1082 = vld [vmem:[%s3 + $0x28] sm:$0xf]
      %v1083 = vld [vmem:[%s3 + $0x2c] sm:$0xf]
      %v1084 = vld [vmem:[%s3 + $0x30] sm:$0xf]
      %v1085 = vld [vmem:[%s3 + $0x34] sm:$0xf]
      %v1086 = vld [vmem:[%s3 + $0x38] sm:$0xf]
      %v1087 = vld [vmem:[%s3 + $0x3c] sm:$0xf]
      %v1088 = vld [vmem:[%s3 + $0x40] sm:$0xf]
      %v1089 = vld [vmem:[%s3 + $0x44] sm:$0xf]
      %v1090 = vld [vmem:[%s3 + $0x48] sm:$0xf]
      %v1091 = vld [vmem:[%s3 + $0x4c] sm:$0xf]
      %v1092 = vld [vmem:[%s3 + $0x50] sm:$0xf]
      %v1093 = vld [vmem:[%s3 + $0x54] sm:$0xf]
      %v1094 = vld [vmem:[%s3 + $0x58] sm:$0xf]
      %v1095 = vld [vmem:[%s3 + $0x5c] sm:$0xf]
      %v1096 = vld [vmem:[%s3 + $0x60] sm:$0xf]
      %v1097 = vld [vmem:[%s3 + $0x64] sm:$0xf]
      %v1098 = vld [vmem:[%s3 + $0x68] sm:$0xf]
      %v1099 = vld [vmem:[%s3 + $0x6c] sm:$0xf]
      %v1100 = vld [vmem:[%s3 + $0x70] sm:$0xf]
      %v1101 = vld [vmem:[%s3 + $0x74] sm:$0xf]
      %v1102 = vld [vmem:[%s3 + $0x78] sm:$0xf]
      %v1103 = vld [vmem:[%s3 + $0x7c] sm:$0xf]
      %v1104 = vld [vmem:[%s4] sm:$0x1]
      %v1106 = vlaneseq
      %v1107 = vshrl.u32 %v1106, 7
      %v1108 = vsub.s32 0, %v1107
      %v1109 = vrot.slane %v1104, %v1108
      %v1143 = vunpack.c.l.b16 %v1072
      %v1144 = vunpack.c.l.b16 %v1073
      %v1145 = vunpack.c.l.b16 %v1074
      %v1146 = vunpack.c.l.b16 %v1075
      %v1147 = vunpack.c.l.b16 %v1076
      %v1148 = vunpack.c.l.b16 %v1077
      %v1149 = vunpack.c.l.b16 %v1078
      %v1150 = vunpack.c.l.b16 %v1079
      %v1151 = vunpack.c.l.b16 %v1080
      %v1152 = vunpack.c.l.b16 %v1081
      %v1153 = vunpack.c.l.b16 %v1082
      %v1154 = vunpack.c.l.b16 %v1083
      %v1155 = vunpack.c.l.b16 %v1084
      %v1156 = vunpack.c.l.b16 %v1085
      %v1157 = vunpack.c.l.b16 %v1086
      %v1158 = vunpack.c.l.b16 %v1087
      %v1159 = vunpack.c.l.b16 %v1088
      %v1160 = vunpack.c.l.b16 %v1089
      %v1161 = vunpack.c.l.b16 %v1090
      %v1162 = vunpack.c.l.b16 %v1091
      %v1163 = vunpack.c.l.b16 %v1092
      %v1164 = vunpack.c.l.b16 %v1093
      %v1165 = vunpack.c.l.b16 %v1094
      %v1166 = vunpack.c.l.b16 %v1095
      %v1167 = vunpack.c.l.b16 %v1096
      %v1168 = vunpack.c.l.b16 %v1097
      %v1169 = vunpack.c.l.b16 %v1098
      %v1170 = vunpack.c.l.b16 %v1099
      %v1171 = vunpack.c.l.b16 %v1100
      %v1172 = vunpack.c.l.b16 %v1101
      %v1173 = vunpack.c.l.b16 %v1102
      %v1174 = vunpack.c.l.b16 %v1103
      %v1175 = vpack.c.b16 %v1144, %v1143
      %v1176 = vpack.c.b16 %v1146, %v1145
      %v1177 = vpack.c.b16 %v1148, %v1147
      %v1178 = vpack.c.b16 %v1150, %v1149
      %v1179 = vpack.c.b16 %v1152, %v1151
      %v1180 = vpack.c.b16 %v1154, %v1153
      %v1181 = vpack.c.b16 %v1156, %v1155
      %v1182 = vpack.c.b16 %v1158, %v1157
      %v1183 = vpack.c.b16 %v1160, %v1159
      %v1184 = vpack.c.b16 %v1162, %v1161
      %v1185 = vpack.c.b16 %v1164, %v1163
      %v1186 = vpack.c.b16 %v1166, %v1165
      %v1187 = vpack.c.b16 %v1168, %v1167
      %v1188 = vpack.c.b16 %v1170, %v1169
      %v1189 = vpack.c.b16 %v1172, %v1171
      %v1190 = vpack.c.b16 %v1174, %v1173
      %1207 = vmatprep.subr.bf16.mxu0 0
      %1208 = vmatpush1.bf16.msra.mxu0 %v1175
      %1209 = vmatprep.subr.bf16.mxu0 0
      %1210 = vmatpush1.bf16.msra.mxu0 %v1176
      %1211 = vmatprep.subr.bf16.mxu0 0
      %1212 = vmatpush1.bf16.msra.mxu0 %v1177
      %1213 = vmatprep.subr.bf16.mxu0 0
      %1214 = vmatpush1.bf16.msra.mxu0 %v1178
      %1215 = vmatprep.subr.bf16.mxu0 0
      %1216 = vmatpush1.bf16.msra.mxu0 %v1179
      %1217 = vmatprep.subr.bf16.mxu0 0
      %1218 = vmatpush1.bf16.msra.mxu0 %v1180
      %1219 = vmatprep.subr.bf16.mxu0 0
      %1220 = vmatpush1.bf16.msra.mxu0 %v1181
      %1221 = vmatprep.subr.bf16.mxu0 0
      %1222 = vmatpush1.bf16.msra.mxu0 %v1182
      %1223 = vmatprep.subr.bf16.mxu0 0
      %1224 = vmatpush1.bf16.msra.mxu0 %v1183
      %1225 = vmatprep.subr.bf16.mxu0 0
      %1226 = vmatpush1.bf16.msra.mxu0 %v1184
      %1227 = vmatprep.subr.bf16.mxu0 0
      %1228 = vmatpush1.bf16.msra.mxu0 %v1185
      %1229 = vmatprep.subr.bf16.mxu0 0
      %1230 = vmatpush1.bf16.msra.mxu0 %v1186
      %1231 = vmatprep.subr.bf16.mxu0 0
      %1232 = vmatpush1.bf16.msra.mxu0 %v1187
      %1233 = vmatprep.subr.bf16.mxu0 0
      %1234 = vmatpush1.bf16.msra.mxu0 %v1188
      %1235 = vmatprep.subr.bf16.mxu0 0
      %1236 = vmatpush1.bf16.msra.mxu0 %v1189
      %1237 = vmatprep.subr.bf16.mxu0 0
      %1238 = vmatpush1.bf16.msra.mxu0 %v1190
      %1239 = vmatprep.mubr.bf16.mxu0 %v1071
      %1240 = vmatmul.mubr.bf16.gmra.mrb[0].mxu0 %v1070
      %v1241 = vpop.f32.mrb[0].mxu0
      %v1242 = vadd.f32 %v1109, %v1241
      %v1243 = vpop.f32.mrb[0].mxu0
      %v1244 = vpop.f32.mrb[0].mxu0
      %v1245 = vadd.f32 %v1109, %v1244
      %v1246 = vpop.f32.mrb[0].mxu0
      %1247 = vdwg.mxu0
      %1248 = vst [vmem:[%s5] sm:$0xff] %v1242
      %1249 = vst [vmem:[%s5 + $0x8] sm:$0xff] %v1245
    $region33: #{triplet_net_forward.1} parent=1 // pred_fallthru
      _
    // Predicated region
    $region34: #{triplet_net_forward.1} parent=1 // pred_check
      _
    $region35: #{triplet_net_forward.1} parent=1 // pred_check_branch
      %1251 = sbr.rel (0) target = $region37
    $region36: #{triplet_net_forward.1} parent=1 // pred_region
      _
    $region37: #{triplet_net_forward.1} parent=1 // pred_fallthru
      _
    // Predicated region
    $region38: #{triplet_net_forward.1} parent=1 // pred_check
      _
    $region39: #{triplet_net_forward.1} parent=1 // pred_check_branch
      %1253 = sbr.rel (0) target = $region41
    $region40: #{triplet_net_forward.1} parent=1 // pred_region
      _
    $region41: #{triplet_net_forward.1} parent=1 // pred_fallthru
      _
    %1254 = vsyncpa [#allocation4], 1

</llo_original>
